<compile_context>
chip_gen: v7x
topology: tpu7x:2x2x1
jax: 0.10.0
libtpu: 0.0.40
codegen_flags: <defaults>
</compile_context>

<pallas_src>
import functools
import math

import jax
import jax.numpy as jnp
from jax.experimental import pallas as pl
from jax.experimental.pallas import tpu as pltpu


def _cdiv(a, b):
    return -(-a // b)


def _round_up(x, m):
    return _cdiv(x, m) * m


def _vmem_capacity_bytes():
    try:
        return int(pltpu.get_tpu_info().vmem_capacity_bytes)
    except Exception:
        return 64 * 1024 * 1024  # v7x-conservative fallback


def _conv1d_kernel(*refs, k_taps, dilation, act, has_halo, has_residual):
    """One (batch, L-tile) grid step: in-VMEM im2col + one deep MXU matmul +
    fused bias/BatchNorm/activation/residual epilogue."""
    it = iter(refs)
    x_ref = next(it)                       # (C_in_pad, TL)   compute dtype
    h_ref = next(it) if has_halo else None  # (C_in_pad, 128)  halo block
    w_ref = next(it)                       # (C_out, K*C_in_pad)
    scale_ref = next(it)                   # (C_out, 1) f32
    shift_ref = next(it)                   # (C_out, 1) f32
    r_ref = next(it) if has_residual else None
    o_ref = next(it)                       # (C_out, TL)

    x = x_ref[...]
    tl = x.shape[-1]
    if has_halo:
        window = jnp.concatenate([x, h_ref[...]], axis=-1)        # (C_in_pad, TL+128)
        taps = [window[:, k * dilation:k * dilation + tl] for k in range(k_taps)]
        slab = jnp.concatenate(taps, axis=0)                       # (K*C_in_pad, TL)
    else:
        slab = x

    acc = jnp.dot(w_ref[...], slab,
                  preferred_element_type=jnp.float32)              # (C_out, TL) f32
    y = acc * scale_ref[...] + shift_ref[...]                      # bias / BatchNorm
    if act == 'tanh':
        y = jnp.tanh(y)                                            # EUP slot
    elif act == 'relu':
        y = jnp.maximum(y, 0.0)
    elif act == 'lrelu':
        y = jnp.where(y >= 0.0, y, 0.01 * y)
    if has_residual:
        y = y + r_ref[...].astype(jnp.float32)
    o_ref[...] = y.astype(o_ref.dtype)


def conv_norm_forward(x, weight, bias=None, *, stride=1, padding=None, dilation=1,
                      bn_gamma=None, bn_beta=None, bn_mean=None, bn_var=None,
                      bn_eps=1e-5, activation=None, residual=None,
                      max_l_tile=None, compute_dtype=jnp.bfloat16,
                      out_dtype=jnp.bfloat16):
    """ConvNorm (+ fused BatchNorm1d / activation / residual) forward.

    x: (B, C_in, L); weight: (C_out, C_in, K); bias: (C_out,) or None.
    BatchNorm (inference) is folded into a per-channel scale/shift epilogue.
    """
    B, C_in, L = x.shape
    C_out, C_in_w, K = weight.shape
    assert C_in_w == C_in
    assert stride == 1  # TODO(synk): stride>1 (SpeakerEncoder subsample convs) needs strided output tiling.
    if padding is None:
        assert K % 2 == 1
        padding = dilation * (K - 1) // 2
    halo = dilation * (K - 1)
    assert halo <= 128, "receptive-field halo must fit one 128-lane block"

    L_out = L + 2 * padding - halo
    assert L_out > 0

    vmem_cap = _vmem_capacity_bytes()
    if max_l_tile is None:
        max_l_tile = 2048 if vmem_cap >= 100 * 1024 * 1024 else 1024
    max_l_tile = max(128, int(max_l_tile))

    # Balanced tail tiling; keep both v7x TensorCores busy for B==1.
    n_lt = _cdiv(L_out, max_l_tile)
    if B == 1 and n_lt == 1 and L_out > 128:
        n_lt = 2
    TL = _round_up(_cdiv(L_out, n_lt), 128)
    L_pad_out = n_lt * TL

    has_halo = K > 1
    has_residual = residual is not None

    # Pad channels so each im2col tap is sublane-tile aligned (bf16: 16 rows).
    row_align = 16 if jnp.dtype(compute_dtype).itemsize == 2 else 8
    C_in_pad = _round_up(C_in, row_align)
    KC = K * C_in_pad

    L_pad_in = L_pad_out + (128 if has_halo else 0)
    right_pad = L_pad_in - padding - L
    assert right_pad >= 0

    x_pad = jnp.pad(x.astype(compute_dtype),
                    ((0, 0), (0, C_in_pad - C_in), (padding, right_pad)))

    # Folded weight: w2d[o, k*C_in_pad + c] = weight[o, c, k] (zero rows for pad).
    wt = jnp.transpose(weight.astype(jnp.float32), (0, 2, 1))       # (C_out, K, C_in)
    wt = jnp.pad(wt, ((0, 0), (0, 0), (0, C_in_pad - C_in)))
    w2d = wt.reshape(C_out, KC).astype(compute_dtype)

    # Fuse bias + BatchNorm into per-channel scale/shift.
    bias_v = (jnp.zeros((C_out,), jnp.float32) if bias is None
              else bias.astype(jnp.float32))
    if bn_gamma is not None:
        inv_std = jax.lax.rsqrt(bn_var.astype(jnp.float32) + bn_eps)
        scale = bn_gamma.astype(jnp.float32) * inv_std
        shift = bn_beta.astype(jnp.float32) + scale * (bias_v - bn_mean.astype(jnp.float32))
    else:
        scale = jnp.ones((C_out,), jnp.float32)
        shift = bias_v
    scale_col = scale.reshape(C_out, 1)
    shift_col = shift.reshape(C_out, 1)

    if has_residual:
        assert residual.shape == (B, C_out, L_out)
        r_pad = jnp.pad(residual, ((0, 0), (0, 0), (0, L_pad_out - L_out)))

    nb = TL // 128
    in_specs = [pl.BlockSpec((None, C_in_pad, TL), lambda b, l: (b, 0, l))]
    operands = [x_pad]
    if has_halo:
        in_specs.append(pl.BlockSpec((None, C_in_pad, 128),
                                     lambda b, l, nb=nb: (b, 0, (l + 1) * nb)))
        operands.append(x_pad)
    in_specs += [
        pl.BlockSpec((C_out, KC), lambda b, l: (0, 0)),
        pl.BlockSpec((C_out, 1), lambda b, l: (0, 0)),
        pl.BlockSpec((C_out, 1), lambda b, l: (0, 0)),
    ]
    operands += [w2d, scale_col, shift_col]
    if has_residual:
        in_specs.append(pl.BlockSpec((None, C_out, TL), lambda b, l: (b, 0, l)))
        operands.append(r_pad)

    cbytes = jnp.dtype(compute_dtype).itemsize
    obytes = jnp.dtype(out_dtype).itemsize
    rbytes = jnp.dtype(residual.dtype).itemsize if has_residual else 0
    footprint = (2 * C_in_pad * TL * cbytes          # x tile (double-buffered)
                 + 2 * C_in_pad * 128 * cbytes       # halo tile
                 + 2 * C_out * KC * cbytes           # folded weight
                 + 4 * C_out * 4                     # scale/shift
                 + 2 * C_out * TL * obytes           # output tile
                 + 2 * C_out * TL * rbytes           # residual tile
                 + 2 * KC * TL * cbytes              # im2col slab + shifted temps
                 + C_in_pad * (TL + 128) * cbytes    # concatenated window
                 + C_out * TL * 4)                   # f32 accumulator
    vmem_limit = int(footprint * 1.5) + (4 << 20)
    vmem_limit = max(vmem_limit, 32 << 20)
    vmem_limit = min(vmem_limit, max(32 << 20, vmem_cap - (8 << 20)))

    cost = pl.CostEstimate(
        flops=2 * B * C_out * KC * L_pad_out,
        transcendentals=(B * C_out * L_pad_out if activation == 'tanh' else 0),
        bytes_accessed=(B * C_in_pad * (L_pad_out + (128 * n_lt if has_halo else 0)) * cbytes
                        + C_out * KC * cbytes + 2 * C_out * 4
                        + B * C_out * L_pad_out * (obytes + rbytes)))

    kernel = functools.partial(
        _conv1d_kernel, k_taps=K, dilation=dilation, act=activation,
        has_halo=has_halo, has_residual=has_residual)

    out = pl.pallas_call(
        kernel,
        out_shape=jax.ShapeDtypeStruct((B, C_out, L_pad_out), out_dtype),
        grid_spec=pltpu.PrefetchScalarGridSpec(
            num_scalar_prefetch=0,
            grid=(B, n_lt),
            in_specs=in_specs,
            out_specs=pl.BlockSpec((None, C_out, TL), lambda b, l: (b, 0, l)),
        ),
        compiler_params=pltpu.CompilerParams(
            dimension_semantics=("parallel", "parallel"),
            vmem_limit_bytes=vmem_limit),
        cost_estimate=cost,
    )(*operands)

    return out[:, :, :L_out]


def make_conv_norm_params(key, in_channels, out_channels, kernel_size,
                          w_init_gain='linear'):
    """Re-implementation of the torch init (xavier_uniform weight, default
    Conv1d uniform bias)."""
    kw, kb = jax.random.split(key)
    gain = {'linear': 1.0, 'tanh': 5.0 / 3.0, 'relu': math.sqrt(2.0)}.get(w_init_gain, 1.0)
    fan_in = in_channels * kernel_size
    fan_out = out_channels * kernel_size
    w_bound = gain * math.sqrt(6.0 / (fan_in + fan_out))
    weight = jax.random.uniform(
        kw, (out_channels, in_channels, kernel_size),
        minval=-w_bound, maxval=w_bound, dtype=jnp.float32)
    b_bound = 1.0 / math.sqrt(fan_in)
    bias = jax.random.uniform(
        kb, (out_channels,), minval=-b_bound, maxval=b_bound, dtype=jnp.float32)
    return weight, bias


if __name__ == "__main__":
    key = jax.random.PRNGKey(0)

    def reference(x, w, b, padding, dilation, *, gamma=None, beta=None, mean=None,
                  var=None, eps=1e-5, act=None, residual=None, cast_dtype=None):
        xs = x if cast_dtype is None else x.astype(cast_dtype).astype(jnp.float32)
        ws = w if cast_dtype is None else w.astype(cast_dtype).astype(jnp.float32)
        y = jax.lax.conv_general_dilated(
            xs, ws, window_strides=(1,), padding=[(padding, padding)],
            rhs_dilation=(dilation,), dimension_numbers=("NCH", "OIH", "NCH"))
        y = y + b.reshape(1, -1, 1)
        if gamma is not None:
            inv = jax.lax.rsqrt(var.reshape(1, -1, 1) + eps)
            y = gamma.reshape(1, -1, 1) * (y - mean.reshape(1, -1, 1)) * inv \
                + beta.reshape(1, -1, 1)
        if act == 'tanh':
            y = jnp.tanh(y)
        elif act == 'relu':
            y = jnp.maximum(y, 0.0)
        if residual is not None:
            y = y + residual
        return y

    # Case 1: tiny "same" conv, plain ConvNorm: B=2, 4->8 channels, L=16, K=3.
    k1, k2, key = jax.random.split(key, 3)
    B, C_in, C_out, L, K = 2, 4, 8, 16, 3
    x = jax.random.normal(k1, (B, C_in, L), dtype=jnp.float32)
    w, b = make_conv_norm_params(k2, C_in, C_out, K, w_init_gain='tanh')
    out = jax.block_until_ready(conv_norm_forward(x, w, b, out_dtype=jnp.float32))
    assert out.shape == (B, C_out, L), out.shape
    ref_bf16 = reference(x, w, b, (K - 1) // 2, 1, cast_dtype=jnp.bfloat16)
    ref_f32 = reference(x, w, b, (K - 1) // 2, 1)
    err_bf16 = float(jnp.max(jnp.abs(out - ref_bf16)))
    err_f32 = float(jnp.max(jnp.abs(out - ref_f32)))
    assert err_bf16 < 2e-3, err_bf16     # tight: same bf16-quantized operands
    assert err_f32 < 1e-1, err_f32       # loose: bf16 vs full-f32 reference

    # Case 2: Postnet-style layer — K=5, fused BatchNorm + tanh, multiple L-tiles.
    keys = jax.random.split(key, 8)
    key = keys[-1]
    B, C_in, C_out, L, K = 2, 8, 16, 300, 5
    x = jax.random.normal(keys[0], (B, C_in, L), dtype=jnp.float32)
    w, b = make_conv_norm_params(keys[1], C_in, C_out, K, w_init_gain='tanh')
    gamma = jax.random.uniform(keys[2], (C_out,), minval=0.5, maxval=1.5)
    beta = 0.1 * jax.random.normal(keys[3], (C_out,))
    mean = 0.5 * jax.random.normal(keys[4], (C_out,))
    var = jax.random.uniform(keys[5], (C_out,), minval=0.5, maxval=1.5)
    out = jax.block_until_ready(conv_norm_forward(
        x, w, b, bn_gamma=gamma, bn_beta=beta, bn_mean=mean, bn_var=var,
        activation='tanh', max_l_tile=128, out_dtype=jnp.float32))
    assert out.shape == (B, C_out, L), out.shape
    ref = reference(x, w, b, (K - 1) // 2, 1, gamma=gamma, beta=beta, mean=mean,
                    var=var, act='tanh', cast_dtype=jnp.bfloat16)
    err = float(jnp.max(jnp.abs(out - ref)))
    assert err < 2e-3, err

    # Case 3: K=1 (no-halo path), relu, fused residual, bf16 output,
    # B=1 forced 2-L-tile split (second TensorCore).
    keys = jax.random.split(key, 4)
    B, C_in, C_out, L, K = 1, 6, 8, 300, 1
    x = jax.random.normal(keys[0], (B, C_in, L), dtype=jnp.float32)
    w, b = make_conv_norm_params(keys[1], C_in, C_out, K, w_init_gain='relu')
    res = jax.random.normal(keys[2], (B, C_out, L), dtype=jnp.float32)
    out = jax.block_until_ready(conv_norm_forward(
        x, w, b, activation='relu', residual=res))     # default bf16 output
    assert out.shape == (B, C_out, L), out.shape
    assert out.dtype == jnp.bfloat16, out.dtype
    ref = reference(x, w, b, 0, 1, act='relu', residual=res, cast_dtype=jnp.bfloat16)
    err = float(jnp.max(jnp.abs(out.astype(jnp.float32) - ref)))
    assert err < 6e-2, err                              # bf16 output rounding

    print("KERNEL_OK")
</pallas_src>

<mosaic_0001>
module attributes {stable_mosaic.version = 11 : i64} {
  func.func @_conv1d_kernel(%arg0: i32, %arg1: i32, %arg2: memref<1x16x128xbf16, #tpu.memory_space<vmem>>, %arg3: memref<1x16x128xbf16, #tpu.memory_space<vmem>>, %arg4: memref<8x48xbf16, #tpu.memory_space<vmem>>, %arg5: memref<8x1xf32, #tpu.memory_space<vmem>>, %arg6: memref<8x1xf32, #tpu.memory_space<vmem>>, %arg7: memref<1x8x128xf32, #tpu.memory_space<vmem>>) attributes {dimension_semantics = [#tpu.dimension_semantics<parallel>, #tpu.dimension_semantics<parallel>], iteration_bounds = array<i64: 2, 1>, scalar_prefetch = 0 : i64, scratch_operands = 0 : i64, tpu.core_type = #tpu.core_type<tc>, window_params = [{transform_indices = @transform_0, window_bounds = array<i64: 1, 16, 128>}, {transform_indices = @transform_1, window_bounds = array<i64: 1, 16, 128>}, {pipeline_mode = #tpu.pipeline_mode<synchronous>, transform_indices = @transform_2, window_bounds = array<i64: 8, 48>}, {pipeline_mode = #tpu.pipeline_mode<synchronous>, transform_indices = @transform_3, window_bounds = array<i64: 8, 1>}, {pipeline_mode = #tpu.pipeline_mode<synchronous>, transform_indices = @transform_4, window_bounds = array<i64: 8, 1>}, {transform_indices = @transform_5, window_bounds = array<i64: 1, 8, 128>}]} {
    %c0 = arith.constant 0 : index
    %c0_0 = arith.constant 0 : index
    %c0_1 = arith.constant 0 : index
    %0 = vector.load %arg2[%c0, %c0_0, %c0_1] : memref<1x16x128xbf16, #tpu.memory_space<vmem>>, vector<1x16x128xbf16>
    %1 = vector.shape_cast %0 : vector<1x16x128xbf16> to vector<16x128xbf16>
    %c0_2 = arith.constant 0 : index
    %c0_3 = arith.constant 0 : index
    %c0_4 = arith.constant 0 : index
    %2 = vector.load %arg3[%c0_2, %c0_3, %c0_4] : memref<1x16x128xbf16, #tpu.memory_space<vmem>>, vector<1x16x128xbf16>
    %3 = vector.shape_cast %2 : vector<1x16x128xbf16> to vector<16x128xbf16>
    %4 = tpu.concatenate %1, %3 in 1 : vector<16x128xbf16>, vector<16x128xbf16> -> vector<16x256xbf16>
    %5 = vector.extract_strided_slice %4 {offsets = [0, 0], sizes = [16, 128], strides = [1, 1]} : vector<16x256xbf16> to vector<16x128xbf16>
    %6 = vector.extract_strided_slice %4 {offsets = [0, 1], sizes = [16, 128], strides = [1, 1]} : vector<16x256xbf16> to vector<16x128xbf16>
    %7 = vector.extract_strided_slice %4 {offsets = [0, 2], sizes = [16, 128], strides = [1, 1]} : vector<16x256xbf16> to vector<16x128xbf16>
    %8 = tpu.concatenate %5, %6, %7 in 0 : vector<16x128xbf16>, vector<16x128xbf16>, vector<16x128xbf16> -> vector<48x128xbf16>
    %c0_5 = arith.constant 0 : index
    %c0_6 = arith.constant 0 : index
    %9 = vector.load %arg4[%c0_5, %c0_6] : memref<8x48xbf16, #tpu.memory_space<vmem>>, vector<8x48xbf16>
    %cst = arith.constant dense<0.000000e+00> : vector<8x128xf32>
    %10 = tpu.matmul %9, %8, %cst {dimension_numbers = #tpu.dot_dimension_numbers<[1], [0], [0], [1], [0, 0, 1, 1], [], []>} : vector<8x48xbf16>, vector<48x128xbf16>, vector<8x128xf32> -> vector<8x128xf32>
    %c0_7 = arith.constant 0 : index
    %c0_8 = arith.constant 0 : index
    %11 = vector.load %arg5[%c0_7, %c0_8] : memref<8x1xf32, #tpu.memory_space<vmem>>, vector<8x1xf32>
    %12 = vector.broadcast %11 : vector<8x1xf32> to vector<8x128xf32>
    %13 = arith.mulf %10, %12 : vector<8x128xf32>
    %c0_9 = arith.constant 0 : index
    %c0_10 = arith.constant 0 : index
    %14 = vector.load %arg6[%c0_9, %c0_10] : memref<8x1xf32, #tpu.memory_space<vmem>>, vector<8x1xf32>
    %15 = vector.broadcast %14 : vector<8x1xf32> to vector<8x128xf32>
    %16 = arith.addf %13, %15 : vector<8x128xf32>
    %c0_11 = arith.constant 0 : index
    %c0_12 = arith.constant 0 : index
    %c0_13 = arith.constant 0 : index
    %17 = vector.load %arg7[%c0_11, %c0_12, %c0_13] : memref<1x8x128xf32, #tpu.memory_space<vmem>>, vector<1x8x128xf32>
    %18 = vector.shape_cast %17 : vector<1x8x128xf32> to vector<8x128xf32>
    %19 = vector.shape_cast %16 : vector<8x128xf32> to vector<1x8x128xf32>
    tpu.vector_store %arg7[%c0_11, %c0_12, %c0_13], %19 {strides = array<i32>} : memref<1x8x128xf32, #tpu.memory_space<vmem>>, vector<1x8x128xf32>,
    return
  }
  func.func @transform_0(%arg0: i32, %arg1: i32) -> (i32, i32, i32) {
    %c0_i32 = arith.constant 0 : i32
    %c0_i32_0 = arith.constant 0 : i32
    return %arg0, %c0_i32, %arg1 : i32, i32, i32
  }
  func.func @transform_1(%arg0: i32, %arg1: i32) -> (i32, i32, i32) {
    %c1_i32 = arith.constant 1 : i32
    %0 = arith.addi %arg1, %c1_i32 : i32
    %c1_i32_0 = arith.constant 1 : i32
    %1 = arith.muli %0, %c1_i32_0 : i32
    %c0_i32 = arith.constant 0 : i32
    %c0_i32_1 = arith.constant 0 : i32
    return %arg0, %c0_i32, %1 : i32, i32, i32
  }
  func.func @transform_2(%arg0: i32, %arg1: i32) -> (i32, i32) {
    %c0_i32 = arith.constant 0 : i32
    %c0_i32_0 = arith.constant 0 : i32
    %c0_i32_1 = arith.constant 0 : i32
    return %c0_i32, %c0_i32_0 : i32, i32
  }
  func.func @transform_3(%arg0: i32, %arg1: i32) -> (i32, i32) {
    %c0_i32 = arith.constant 0 : i32
    %c0_i32_0 = arith.constant 0 : i32
    %c0_i32_1 = arith.constant 0 : i32
    return %c0_i32, %c0_i32_0 : i32, i32
  }
  func.func @transform_4(%arg0: i32, %arg1: i32) -> (i32, i32) {
    %c0_i32 = arith.constant 0 : i32
    %c0_i32_0 = arith.constant 0 : i32
    %c0_i32_1 = arith.constant 0 : i32
    return %c0_i32, %c0_i32_0 : i32, i32
  }
  func.func @transform_5(%arg0: i32, %arg1: i32) -> (i32, i32, i32) {
    %c0_i32 = arith.constant 0 : i32
    %c0_i32_0 = arith.constant 0 : i32
    return %arg0, %c0_i32, %arg1 : i32, i32, i32
  }
}

</mosaic_0001>

<llo_original>
// kernel: tpu_custom_call.1
$region0: #{tpu_custom_call.1}
  #allocation0 [shape = 'u32[]', space=smem, size = 0x4, offset = 0x4, fixed_abs, tag = 'smem constant byte address 0x4 - core index']
  #allocation1 [shape = 'u32[144,128]{1,0:T(1,128)}', space=vmem, size = 0x12000, scoped, tag = 'internal scratch']
  %s0 = inlined_call_operand.hbm [shape: bf16[2,16,256], index: 0, kind: input, shape index: {}]
  %s1 = inlined_call_operand.hbm [shape: bf16[2,16,256], index: 1, kind: input, shape index: {}]
  %s2 = inlined_call_operand.vmem [shape: bf16[8,48], index: 2, kind: input, shape index: {}]
  %s3 = inlined_call_operand.vmem [shape: f32[8,1], index: 3, kind: input, shape index: {}]
  %s4 = inlined_call_operand.vmem [shape: f32[8,1], index: 4, kind: input, shape index: {}]
  %s5 = inlined_call_operand.hbm [shape: f32[2,8,128], index: 5, kind: output, shape index: {}]
  %s6 = sld [smem:[#allocation0]]
  $region61: #{tpu_custom_call.1} parent=0
    _
  %s8 = ssub.s32 1, %s6
  %s9 = scalar_select 0, %s8, %s6
  $region1: #{tpu_custom_call.1} parent=0
    #allocation2 [shape = 'u8[8192]{0}', space=vmem, size = 0x2000, scoped, tag = 'input window, operand 0']
    #allocation3 [shape = 's32[2]{0}', space=sflag, size = 0x8, scoped, tag = 'scoped memory for tpu_custom_call.1']
    #allocation4 [shape = 's32[2]{0}', space=sflag, size = 0x8, scoped, tag = 'scoped memory for tpu_custom_call.1']
    #allocation5 [shape = 'u8[8192]{0}', space=vmem, size = 0x2000, scoped, tag = 'input window, operand 1']
    #allocation6 [shape = 's32[2]{0}', space=sflag, size = 0x8, scoped, tag = 'scoped memory for tpu_custom_call.1']
    #allocation7 [shape = 'u8[8192]{0}', space=vmem, size = 0x2000, scoped, tag = 'output window, operand 0']
    %10 = vsyncpa [#allocation3], 0
    %s11 = scalar_lea.sflag [#allocation3], 1
    %12 = vsyncpa %s11, 0
    %13 = vsyncpa [#allocation6], 0
    %s14 = scalar_lea.sflag [#allocation6], 1
    %15 = vsyncpa %s14, 0
    %16 = vsyncpa [#allocation4], 0
    %s17 = scalar_lea.sflag [#allocation4], 1
    %18 = vsyncpa %s17, 0
    loop: start=0, step=1, limit=4
    $region2: #{tpu_custom_call.1} parent=1 // loop_pre_header
      _
    $region3: #{tpu_custom_call.1} parent=1 // loop_header
      %s20 = sphi 0, %s24
      %p21 = scmp.ge.s32.totalorder %s20, 4
      %s27 = sphi 0, %s39
      %s28 = sphi 0, %s35
      %s29 = sphi 0, %s27
      %s30 = sphi 0, %s28
      %s31 = sphi 0, %s29
      %s32 = sphi 0, %s30
      %s44 = sphi 0, %s46
      %s47 = sphi 0, %s44
      %s48 = sphi 0, %s47
      %s64 = sphi 0, %s48
      %s74 = sphi 0, %s76
      %s77 = sphi 0, %s74
      %s78 = sphi 0, %s77
      %s94 = sphi 0, %s78
      %s98 = sphi 0, %s98
      %s100 = sphi 0, %s98
      %s101 = sphi 0, %s100
      %s115 = sphi 0, %s101
      %s119 = sphi 0, %s119
      %s121 = sphi 0, %s119
      %s122 = sphi 0, %s121
      %s136 = sphi 0, %s122
      %s140 = sphi 0, %s140
      %s142 = sphi 0, %s140
      %s143 = sphi 0, %s142
      %s157 = sphi 0, %s143
      %s165 = sphi 0, %s167
      %s168 = sphi 0, %s165
      %s169 = sphi 0, %s168
      %s185 = sphi 0, %s169
    $region4: #{tpu_custom_call.1} parent=1 // loop_header_branch
      %23 = sbr.rel (%p21) target = $region8
    $region5: #{tpu_custom_call.1} parent=1 // loop_body
      %s25 = ssub.s32 %s20, 1
      %s26 = ssub.s32 %s20, 2
      %s33 = sadd.s32 1, %s28
      %p34 = scmp.ge.s32.totalorder %s33, 1
      %s35 = scalar_select %p34, 0, %s33
      %s36 = sadd.s32 1, %s27
      %s37 = scalar_select %p34, %s36, %s27
      %p38 = scmp.ge.s32.totalorder %s37, 2
      %s39 = scalar_select %p38, 0, %s37
      %s40 = ssub.s32 %s27, %s39
      %s41 = ssub.s32 %s28, %s35
      %s42 = sor.u32 %s40, %s41
      %p43 = scmp.eq.s32.totalorder %s42, 0
      %s45 = sadd.s32 %s44, 1
      %s46 = scalar_select %p43, %s44, %s45
      %p49 = pneg %p43
      %p50 = scmp.eq.s32.totalorder %s20, 1
      %p51 = por %p49, %p50
      %p52 = scmp.ne.s32.totalorder %s44, %s47
      %p53 = scmp.eq.s32.totalorder %s20, 0
      %p54 = por %p52, %p53
      %p55 = scmp.ne.s32.totalorder %s44, %s47
      %p56 = scmp.eq.s32.totalorder %s25, 1
      %p57 = por %p55, %p56
      %p58 = scmp.ne.s32.totalorder %s47, %s48
      %p59 = scmp.eq.s32.totalorder %s25, 0
      %p60 = por %p58, %p59
      %p61 = scmp.ne.s32.totalorder %s47, %s48
      %p62 = scmp.eq.s32.totalorder %s26, 1
      %p63 = por %p61, %p62
      %p65 = scmp.ne.s32.totalorder %s48, %s64
      %p66 = scmp.eq.s32.totalorder %s26, 0
      %p67 = por %p65, %p66
      %s68 = sadd.s32 %s28, 1
      %s69 = sadd.s32 %s35, 1
      %s70 = ssub.s32 %s27, %s39
      %s71 = ssub.s32 %s68, %s69
      %s72 = sor.u32 %s70, %s71
      %p73 = scmp.eq.s32.totalorder %s72, 0
      %s75 = sadd.s32 %s74, 1
      %s76 = scalar_select %p73, %s74, %s75
      %p79 = pneg %p73
      %p80 = scmp.eq.s32.totalorder %s20, 1
      %p81 = por %p79, %p80
      %p82 = scmp.ne.s32.totalorder %s74, %s77
      %p83 = scmp.eq.s32.totalorder %s20, 0
      %p84 = por %p82, %p83
      %p85 = scmp.ne.s32.totalorder %s74, %s77
      %p86 = scmp.eq.s32.totalorder %s25, 1
      %p87 = por %p85, %p86
      %p88 = scmp.ne.s32.totalorder %s77, %s78
      %p89 = scmp.eq.s32.totalorder %s25, 0
      %p90 = por %p88, %p89
      %p91 = scmp.ne.s32.totalorder %s77, %s78
      %p92 = scmp.eq.s32.totalorder %s26, 1
      %p93 = por %p91, %p92
      %p95 = scmp.ne.s32.totalorder %s78, %s94
      %p96 = scmp.eq.s32.totalorder %s26, 0
      %p97 = por %p95, %p96
      %s99 = sadd.s32 %s98, 1
      %p102 = scmp.eq.s32.totalorder %s20, 1
      %p103 = scmp.ne.s32.totalorder %s98, %s100
      %p104 = scmp.eq.s32.totalorder %s20, 0
      %p105 = por %p103, %p104
      %p106 = scmp.ne.s32.totalorder %s98, %s100
      %p107 = scmp.eq.s32.totalorder %s25, 1
      %p108 = por %p106, %p107
      %p109 = scmp.ne.s32.totalorder %s100, %s101
      %p110 = scmp.eq.s32.totalorder %s25, 0
      %p111 = por %p109, %p110
      %p112 = scmp.ne.s32.totalorder %s100, %s101
      %p113 = scmp.eq.s32.totalorder %s26, 1
      %p114 = por %p112, %p113
      %p116 = scmp.ne.s32.totalorder %s101, %s115
      %p117 = scmp.eq.s32.totalorder %s26, 0
      %p118 = por %p116, %p117
      %s120 = sadd.s32 %s119, 1
      %p123 = scmp.eq.s32.totalorder %s20, 1
      %p124 = scmp.ne.s32.totalorder %s119, %s121
      %p125 = scmp.eq.s32.totalorder %s20, 0
      %p126 = por %p124, %p125
      %p127 = scmp.ne.s32.totalorder %s119, %s121
      %p128 = scmp.eq.s32.totalorder %s25, 1
      %p129 = por %p127, %p128
      %p130 = scmp.ne.s32.totalorder %s121, %s122
      %p131 = scmp.eq.s32.totalorder %s25, 0
      %p132 = por %p130, %p131
      %p133 = scmp.ne.s32.totalorder %s121, %s122
      %p134 = scmp.eq.s32.totalorder %s26, 1
      %p135 = por %p133, %p134
      %p137 = scmp.ne.s32.totalorder %s122, %s136
      %p138 = scmp.eq.s32.totalorder %s26, 0
      %p139 = por %p137, %p138
      %s141 = sadd.s32 %s140, 1
      %p144 = scmp.eq.s32.totalorder %s20, 1
      %p145 = scmp.ne.s32.totalorder %s140, %s142
      %p146 = scmp.eq.s32.totalorder %s20, 0
      %p147 = por %p145, %p146
      %p148 = scmp.ne.s32.totalorder %s140, %s142
      %p149 = scmp.eq.s32.totalorder %s25, 1
      %p150 = por %p148, %p149
      %p151 = scmp.ne.s32.totalorder %s142, %s143
      %p152 = scmp.eq.s32.totalorder %s25, 0
      %p153 = por %p151, %p152
      %p154 = scmp.ne.s32.totalorder %s142, %s143
      %p155 = scmp.eq.s32.totalorder %s26, 1
      %p156 = por %p154, %p155
      %p158 = scmp.ne.s32.totalorder %s143, %s157
      %p159 = scmp.eq.s32.totalorder %s26, 0
      %p160 = por %p158, %p159
      %s161 = ssub.s32 %s27, %s39
      %s162 = ssub.s32 %s28, %s35
      %s163 = sor.u32 %s161, %s162
      %p164 = scmp.eq.s32.totalorder %s163, 0
      %s166 = sadd.s32 %s165, 1
      %s167 = scalar_select %p164, %s165, %s166
      %p170 = pneg %p164
      %p171 = scmp.eq.s32.totalorder %s20, 1
      %p172 = por %p170, %p171
      %p173 = scmp.ne.s32.totalorder %s165, %s168
      %p174 = scmp.eq.s32.totalorder %s20, 0
      %p175 = por %p173, %p174
      %p176 = scmp.ne.s32.totalorder %s165, %s168
      %p177 = scmp.eq.s32.totalorder %s25, 1
      %p178 = por %p176, %p177
      %p179 = scmp.ne.s32.totalorder %s168, %s169
      %p180 = scmp.eq.s32.totalorder %s25, 0
      %p181 = por %p179, %p180
      %p182 = scmp.ne.s32.totalorder %s168, %s169
      %p183 = scmp.eq.s32.totalorder %s26, 1
      %p184 = por %p182, %p183
      %p186 = scmp.ne.s32.totalorder %s169, %s185
      %p187 = scmp.eq.s32.totalorder %s26, 0
      %p188 = por %p186, %p187
      %p189 = scmp.le.s32.totalorder 1, %s20
      %p190 = scmp.lt.s32.totalorder %s20, 3
      %p191 = pnand %p189, %p190
      %p192 = pneg %p191
      // Predicated region
      $region9: #{tpu_custom_call.1} parent=5 // pred_check
        _
      $region10: #{tpu_custom_call.1} parent=5 // pred_check_branch
        %194 = sbr.rel (%p191) target = $region12
      $region11: #{tpu_custom_call.1} parent=5 // pred_region
        %s195 = ssub.s32 %s20, 1
        // Predicated region
        $region13: #{tpu_custom_call.1} parent=11 // pred_check
          %p196 = pneg %p111
        $region14: #{tpu_custom_call.1} parent=11 // pred_check_branch
          %198 = sbr.rel (%p196) target = $region16
        $region15: #{tpu_custom_call.1} parent=11 // pred_region
          _
        $region16: #{tpu_custom_call.1} parent=11 // pred_fallthru
          _
        // Predicated region
        $region17: #{tpu_custom_call.1} parent=11 // pred_check
          %p199 = pneg %p132
        $region18: #{tpu_custom_call.1} parent=11 // pred_check_branch
          %201 = sbr.rel (%p199) target = $region20
        $region19: #{tpu_custom_call.1} parent=11 // pred_region
          _
        $region20: #{tpu_custom_call.1} parent=11 // pred_fallthru
          _
        // Predicated region
        $region21: #{tpu_custom_call.1} parent=11 // pred_check
          %p202 = pneg %p153
        $region22: #{tpu_custom_call.1} parent=11 // pred_check_branch
          %204 = sbr.rel (%p202) target = $region24
        $region23: #{tpu_custom_call.1} parent=11 // pred_region
          _
        $region24: #{tpu_custom_call.1} parent=11 // pred_fallthru
          _
      $region12: #{tpu_custom_call.1} parent=5 // pred_fallthru
        _
      %p205 = scmp.lt.s32.totalorder %s20, 2
      // Predicated region
      $region25: #{tpu_custom_call.1} parent=5 // pred_check
        %p206 = pneg %p205
      $region26: #{tpu_custom_call.1} parent=5 // pred_check_branch
        %208 = sbr.rel (%p206) target = $region28
      $region27: #{tpu_custom_call.1} parent=5 // pred_region
        // Predicated region
        $region29: #{tpu_custom_call.1} parent=27 // pred_check
          %p209 = pneg %p54
        $region30: #{tpu_custom_call.1} parent=27 // pred_check_branch
          %211 = sbr.rel (%p209) target = $region32
        $region31: #{tpu_custom_call.1} parent=27 // pred_region
          %s212 = sand.u32 %s44, 1
          %s213 = scalar_lea.sflag [#allocation3], %s212
          %s214 = sand.u32 %s44, 1
          %s215 = smul.addr %s214, 8
          %s216 = scalar_lea.vmem [#allocation2], %s215
          %s218 = ssub.s32 128, 128
          %219 = vsyncadd %s213, %s218
          %s220 = smul.addr %s27, 4
          %s221 = sadd.s32 %s28, %s220
          %s222 = smul.addr %s221, 64
          %s223 = scalar_lea.hbm %s0, %s222
          %s224 = sshll.u32 %s216, 4
          %s225 = int_to_ptr.vmem [resolvable:$true] %s224
          %230 = dma.hbm_to_vmem [thread:$0]  %s223, 128, %s225, %s213, 128, 64, 4
        $region32: #{tpu_custom_call.1} parent=27 // pred_fallthru
          _
        // Predicated region
        $region33: #{tpu_custom_call.1} parent=27 // pred_check
          %p231 = pneg %p84
        $region34: #{tpu_custom_call.1} parent=27 // pred_check_branch
          %233 = sbr.rel (%p231) target = $region36
        $region35: #{tpu_custom_call.1} parent=27 // pred_region
          %s234 = sand.u32 %s74, 1
          %s235 = scalar_lea.sflag [#allocation6], %s234
          %s236 = sand.u32 %s74, 1
          %s237 = smul.addr %s236, 8
          %s238 = scalar_lea.vmem [#allocation5], %s237
          %s239 = sadd.s32 %s28, 1
          %s241 = ssub.s32 128, 128
          %242 = vsyncadd %s235, %s241
          %s243 = smul.addr %s27, 4
          %s244 = sadd.s32 %s239, %s243
          %s245 = smul.addr %s244, 64
          %s246 = scalar_lea.hbm %s1, %s245
          %s247 = sshll.u32 %s238, 4
          %s248 = int_to_ptr.vmem [resolvable:$true] %s247
          %253 = dma.hbm_to_vmem [thread:$0]  %s246, 128, %s248, %s235, 128, 64, 4
        $region36: #{tpu_custom_call.1} parent=27 // pred_fallthru
          _
      $region28: #{tpu_custom_call.1} parent=5 // pred_fallthru
        _
      %p254 = scmp.le.s32.totalorder 1, %s20
      %p255 = scmp.lt.s32.totalorder %s20, 3
      %p256 = pnand %p254, %p255
      %p257 = pneg %p256
      // Predicated region
      $region37: #{tpu_custom_call.1} parent=5 // pred_check
        _
      $region38: #{tpu_custom_call.1} parent=5 // pred_check_branch
        %259 = sbr.rel (%p256) target = $region40
      $region39: #{tpu_custom_call.1} parent=5 // pred_region
        %s260 = ssub.s32 %s20, 1
        %s261 = sand.u32 %s47, 1
        %s262 = scalar_lea.sflag [#allocation3], %s261
        %s263 = sand.u32 %s47, 1
        %s264 = smul.addr %s263, 8
        %s265 = scalar_lea.vmem [#allocation2], %s264
        // Predicated region
        $region41: #{tpu_custom_call.1} parent=39 // pred_check
          %p266 = pneg %p60
        $region42: #{tpu_custom_call.1} parent=39 // pred_check_branch
          %268 = sbr.rel (%p266) target = $region44
        $region43: #{tpu_custom_call.1} parent=39 // pred_region
          %269 = dma.done %s262, 128
        $region44: #{tpu_custom_call.1} parent=39 // pred_fallthru
          _
        %s270 = sand.u32 %s77, 1
        %s271 = scalar_lea.sflag [#allocation6], %s270
        %s272 = sand.u32 %s77, 1
        %s273 = smul.addr %s272, 8
        %s274 = scalar_lea.vmem [#allocation5], %s273
        // Predicated region
        $region45: #{tpu_custom_call.1} parent=39 // pred_check
          %p275 = pneg %p90
        $region46: #{tpu_custom_call.1} parent=39 // pred_check_branch
          %277 = sbr.rel (%p275) target = $region48
        $region47: #{tpu_custom_call.1} parent=39 // pred_region
          %278 = dma.done %s271, 128
        $region48: #{tpu_custom_call.1} parent=39 // pred_fallthru
          _
        %s279 = sand.u32 %s47, 1
        %s280 = scalar_lea.sflag [#allocation3], %s279
        %s281 = sand.u32 %s47, 1
        %s282 = smul.addr %s281, 8
        %s283 = scalar_lea.vmem [#allocation2], %s282
        %p284 = pneg %p60
        %p285 = pneg %p57
        %s286 = sand.u32 %s77, 1
        %s287 = scalar_lea.sflag [#allocation6], %s286
        %s288 = sand.u32 %s77, 1
        %s289 = smul.addr %s288, 8
        %s290 = scalar_lea.vmem [#allocation5], %s289
        %p291 = pneg %p90
        %p292 = pneg %p87
        %p293 = pneg %p111
        %p294 = pneg %p108
        %p295 = pneg %p132
        %p296 = pneg %p129
        %p297 = pneg %p153
        %p298 = pneg %p150
        %p299 = pneg %p181
        %p300 = pneg %p178
        %s301 = sand.u32 %s168, 1
        %s302 = scalar_lea.sflag [#allocation4], %s301
        %s303 = sand.u32 %s168, 1
        %s304 = smul.addr %s303, 8
        %s305 = scalar_lea.vmem [#allocation7], %s304
        %s306 = sadd.s32 %s30, 1
        %v308 = vld [vmem:[%s265] sm:$0xf]
        %v309 = vld [vmem:[%s265 + $0x4] sm:$0xf]
        %v310 = vld [vmem:[%s274] sm:$0xf]
        %v311 = vld [vmem:[%s274 + $0x4] sm:$0xf]
        %v314 = vunpack.c.l.b16 %v308
        %v315 = vunpack.c.l.b16 %v309
        %v316 = vpack.c.b16 %v315, %v314
        %v320 = vunpack.c.l.b16 %v310
        %v321 = vunpack.c.l.b16 %v311
        %v322 = vpack.c.b16 %v321, %v320
        %323 = vrot.lane.b32.xlu0 %v316, 127
        %v324 = vpop.permute.xlu0 %323
        %325 = vrot.lane.b32.xlu0 %v322, 127
        %v326 = vpop.permute.xlu0 %325
        %vm327 = vcmask 1039360
        %v328 = vsel %vm327, %v324, %v326
        %330 = vrot.lane.b32.xlu0 %v316, 126
        %v331 = vpop.permute.xlu0 %330
        %332 = vrot.lane.b32.xlu0 %v322, 126
        %v333 = vpop.permute.xlu0 %332
        %vm334 = vcmask 1031168
        %v335 = vsel %vm334, %v331, %v333
        %v337 = vld [vmem:[%s2] sm:$0xf]
        %vm338 = vcmask 392192
        %v340 = vsel %vm338, %v337, 0
        %342 = vmatprep.subr.bf16.mxu0 0
        %343 = vmatpush1.bf16.msra.mxu0 %v316
        %344 = vmatprep.subr.bf16.mxu0 0
        %345 = vmatpush1.bf16.msra.mxu0 %v328
        %346 = vmatprep.subr.bf16.mxu0 0
        %347 = vmatpush1.bf16.msra.mxu0 %v335
        %348 = vmatprep.subr.bf16.mxu0 0
        %349 = vmatpush1.bf16.msra.mxu0 0
        %350 = vmatprep.subr.bf16.mxu0 0
        %351 = vmatpush1.bf16.msra.mxu0 0
        %352 = vmatprep.subr.bf16.mxu0 0
        %353 = vmatpush1.bf16.msra.mxu0 0
        %354 = vmatprep.subr.bf16.mxu0 0
        %355 = vmatpush1.bf16.msra.mxu0 0
        %356 = vmatprep.subr.bf16.mxu0 0
        %357 = vmatpush1.bf16.msra.mxu0 0
        %358 = vmatprep.subr.bf16.mxu0 0
        %359 = vmatpush1.bf16.msra.mxu0 0
        %360 = vmatprep.subr.bf16.mxu0 0
        %361 = vmatpush1.bf16.msra.mxu0 0
        %362 = vmatprep.subr.bf16.mxu0 0
        %363 = vmatpush1.bf16.msra.mxu0 0
        %364 = vmatprep.subr.bf16.mxu0 0
        %365 = vmatpush1.bf16.msra.mxu0 0
        %366 = vmatprep.subr.bf16.mxu0 0
        %367 = vmatpush1.bf16.msra.mxu0 0
        %368 = vmatprep.subr.bf16.mxu0 0
        %369 = vmatpush1.bf16.msra.mxu0 0
        %370 = vmatprep.subr.bf16.mxu0 0
        %371 = vmatpush1.bf16.msra.mxu0 0
        %372 = vmatprep.subr.bf16.mxu0 0
        %373 = vmatpush1.bf16.msra.mxu0 0
        %374 = vmatprep.mubr.bf16.mxu0 0
        %375 = vmatmul.mubr.bf16.gmra.mrb[0].mxu0 %v340
        %v376 = vpop.f32.mrb[0].mxu0
        %v377 = vadd.f32 0.0, %v376
        %v378 = vpop.f32.mrb[0].mxu0
        %v379 = vpop.f32.mrb[0].mxu0
        %v380 = vpop.f32.mrb[0].mxu0
        %381 = vdwg.mxu0
        %v382 = vld [vmem:[%s3] sm:$0xff]
        %384 = vset.pattern.permute.xlu0 0
        %385 = vperm.xlu0 %384, %v382
        %v386 = vpop.permute.xlu0 %385
        %v388 = vmul.f32 %v377, %v386
        %v389 = vld [vmem:[%s4] sm:$0xff]
        %391 = vset.pattern.permute.xlu0 0
        %392 = vperm.xlu0 %391, %v389
        %v393 = vpop.permute.xlu0 %392
        %v395 = vadd.f32 %v388, %v393
        %396 = vst [vmem:[%s305] sm:$0xff] %v395
        %s397 = sand.u32 %s168, 1
        %s398 = scalar_lea.sflag [#allocation4], %s397
        %s399 = sand.u32 %s168, 1
        %s400 = smul.addr %s399, 8
        %s401 = scalar_lea.vmem [#allocation7], %s400
        // Predicated region
        $region49: #{tpu_custom_call.1} parent=39 // pred_check
          %p402 = pneg %p178
        $region50: #{tpu_custom_call.1} parent=39 // pred_check_branch
          %404 = sbr.rel (%p402) target = $region52
        $region51: #{tpu_custom_call.1} parent=39 // pred_region
          %s406 = ssub.s32 128, 128
          %407 = vsyncadd %s398, %s406
          %s408 = sadd.s32 %s30, %s29
          %s409 = smul.addr %s408, 128
          %s410 = scalar_lea.hbm %s5, %s409
          %s412 = sshll.u32 %s401, 4
          %s413 = int_to_ptr.vmem [resolvable:$true] %s412
          %415 = dma.vmem_to_hbm [thread:$0]  %s413, 128, %s410, %s398
        $region52: #{tpu_custom_call.1} parent=39 // pred_fallthru
          _
      $region40: #{tpu_custom_call.1} parent=5 // pred_fallthru
        _
      %p416 = scmp.le.s32.totalorder 2, %s20
      // Predicated region
      $region53: #{tpu_custom_call.1} parent=5 // pred_check
        %p417 = pneg %p416
      $region54: #{tpu_custom_call.1} parent=5 // pred_check_branch
        %419 = sbr.rel (%p417) target = $region56
      $region55: #{tpu_custom_call.1} parent=5 // pred_region
        %s420 = ssub.s32 %s20, 2
        // Predicated region
        $region57: #{tpu_custom_call.1} parent=55 // pred_check
          %p421 = pneg %p184
        $region58: #{tpu_custom_call.1} parent=55 // pred_check_branch
          %423 = sbr.rel (%p421) target = $region60
        $region59: #{tpu_custom_call.1} parent=55 // pred_region
          %s424 = sand.u32 %s169, 1
          %s425 = scalar_lea.sflag [#allocation4], %s424
          %s426 = sand.u32 %s169, 1
          %s427 = smul.addr %s426, 8
          %s428 = scalar_lea.vmem [#allocation7], %s427
          %429 = dma.done %s425, 128
        $region60: #{tpu_custom_call.1} parent=55 // pred_fallthru
          _
      $region56: #{tpu_custom_call.1} parent=5 // pred_fallthru
        _
    $region6: #{tpu_custom_call.1} parent=1 // loop_footer
      %s24 = sadd.s32 1, %s20
    $region7: #{tpu_custom_call.1} parent=1 // loop_footer_branch
      %19 = sbr.rel target = $region3
    $region8: #{tpu_custom_call.1} parent=1 // loop_exit
      _
    %430 = vsyncpa [#allocation3], 1
    %s431 = scalar_lea.sflag [#allocation3], 1
    %432 = vsyncpa %s431, 1
    %433 = vsyncpa [#allocation6], 1
    %s434 = scalar_lea.sflag [#allocation6], 1
    %435 = vsyncpa %s434, 1
    %436 = vsyncpa [#allocation4], 1
    %s437 = scalar_lea.sflag [#allocation4], 1
    %438 = vsyncpa %s437, 1

</llo_original>
